<compile_context>
chip_gen: v7x
topology: tpu7x:2x2x1
jax: 0.10.0
libtpu: 0.0.40
codegen_flags: <defaults>
</compile_context>

<pallas_src>
import functools
import math

import jax
import jax.numpy as jnp
from jax.experimental import pallas as pl
from jax.experimental.pallas import tpu as pltpu


def _round_up(x, m):
    return ((x + m - 1) // m) * m


def _erf_gelu(x):
    # Exact erf-based gelu, matching the reference `gelu` (not tanh approx).
    return x * 0.5 * (1.0 + jax.lax.erf(x * (1.0 / math.sqrt(2.0))))


# ----------------------------------------------------------------------------
# Kernel: dense -> gelu -> LayerNorm   (one token tile per grid step)
# ----------------------------------------------------------------------------
def head_transform_kernel(x_ref, w_ref, b_ref, gamma_ref, beta_ref, out_ref,
                          *, hs, hp):
    """
    x_ref:     (tm, Hp)  token tile (zero-padded beyond Hs lanes / M rows)
    w_ref:     (Hp, Hp)  dense weight, [in, out], zero-padded
    b_ref:     (1, Hp)   dense bias, zero-padded
    gamma_ref: (1, Hp)   LayerNorm weight, zero-padded
    beta_ref:  (1, Hp)   LayerNorm bias, zero-padded
    out_ref:   (tm, Hp)  transformed hidden states tile
    """
    x = x_ref[...].astype(jnp.float32)

    # dense + bias  (MXU, f32 accumulate)
    h = jnp.dot(x, w_ref[...], preferred_element_type=jnp.float32) + b_ref[...]

    # gelu (erf form).  Padded lanes stay exactly 0 (0-weight columns, 0 bias).
    h = _erf_gelu(h)

    # LayerNorm (TF style, eps inside sqrt), statistics over the TRUE Hs lanes.
    inv_hs = jnp.float32(1.0 / hs)
    u = jnp.sum(h, axis=-1, keepdims=True) * inv_hs          # pads are 0 -> sum ok
    centered = h - u
    if hs != hp:
        lane = jax.lax.broadcasted_iota(jnp.int32, h.shape, dimension=1)
        c_for_var = jnp.where(lane < hs, centered, 0.0)       # mask pads in var
    else:
        c_for_var = centered
    s = jnp.sum(c_for_var * c_for_var, axis=-1, keepdims=True) * inv_hs
    h = centered * jax.lax.rsqrt(s + 1e-12)                   # rsqrt -> EUP slot

    out = gamma_ref[...] * h + beta_ref[...]                  # pads: 0*h + 0 = 0
    out_ref[...] = out.astype(out_ref.dtype)


# ----------------------------------------------------------------------------
# Wrapper (supernet sampling / padding / reshapes are glue in plain JAX)
# ----------------------------------------------------------------------------
def super_bert_prediction_head_transform(hidden_states, params,
                                          sample_hidden_dim, tm=256):
    B, S, H = hidden_states.shape
    Hs = sample_hidden_dim
    Hp = _round_up(Hs, 128)          # lane-dense hidden dim
    M = B * S

    # Row tile: big (256) for real shapes, clamped for tiny test shapes.
    tm_eff = max(8, min(tm, _round_up(M, 8)))
    Mp = _round_up(M, tm_eff)

    # --- supernet parameter sampling (torch layout: weight[out, in]) --------
    dense_w = params["dense_w"][:Hs, :Hs]
    dense_b = params["dense_b"][:Hs]
    ln_g = params["ln_w"][:Hs]
    ln_b = params["ln_b"][:Hs]

    # --- pad to (Mp, Hp) / (Hp, Hp) for lane density -------------------------
    pad_h = Hp - Hs
    x = hidden_states[..., :Hs].reshape(M, Hs).astype(jnp.float32)
    x = jnp.pad(x, ((0, Mp - M), (0, pad_h)))
    w_t = jnp.pad(dense_w.T.astype(jnp.float32), ((0, pad_h), (0, pad_h)))  # [in, out]
    b = jnp.pad(dense_b.astype(jnp.float32), (0, pad_h)).reshape(1, Hp)
    gamma = jnp.pad(ln_g.astype(jnp.float32), (0, pad_h)).reshape(1, Hp)
    beta = jnp.pad(ln_b.astype(jnp.float32), (0, pad_h)).reshape(1, Hp)

    kernel = functools.partial(head_transform_kernel, hs=Hs, hp=Hp)

    flops = 2 * Mp * Hp * Hp + 12 * Mp * Hp
    bytes_accessed = 4 * (2 * Mp * Hp + Hp * Hp + 3 * Hp)

    out = pl.pallas_call(
        kernel,
        out_shape=jax.ShapeDtypeStruct((Mp, Hp), jnp.float32),
        grid_spec=pltpu.PrefetchScalarGridSpec(
            num_scalar_prefetch=0,
            grid=(Mp // tm_eff,),
            in_specs=[
                pl.BlockSpec((tm_eff, Hp), lambda i: (i, 0)),  # x tile
                pl.BlockSpec((Hp, Hp), lambda i: (0, 0)),      # dense W (resident)
                pl.BlockSpec((1, Hp), lambda i: (0, 0)),       # dense b
                pl.BlockSpec((1, Hp), lambda i: (0, 0)),       # LN gamma
                pl.BlockSpec((1, Hp), lambda i: (0, 0)),       # LN beta
            ],
            out_specs=pl.BlockSpec((tm_eff, Hp), lambda i: (i, 0)),
        ),
        compiler_params=pltpu.CompilerParams(
            dimension_semantics=("parallel",),        # shard row tiles across TCs (v7x)
            vmem_limit_bytes=32 * 1024 * 1024,
        ),
        cost_estimate=pl.CostEstimate(
            flops=flops, transcendentals=Mp * Hp, bytes_accessed=bytes_accessed),
    )(x, w_t, b, gamma, beta)

    return out[:M, :Hs].reshape(B, S, Hs)


# ----------------------------------------------------------------------------
# Pure-JAX reference (for correctness check)
# ----------------------------------------------------------------------------
def reference(hidden_states, params, sample_hidden_dim):
    Hs = sample_hidden_dim
    x = hidden_states[..., :Hs]

    dense_w = params["dense_w"][:Hs, :Hs]
    dense_b = params["dense_b"][:Hs]
    h = x @ dense_w.T + dense_b
    h = h * 0.5 * (1.0 + jax.lax.erf(h / math.sqrt(2.0)))
    u = jnp.mean(h, axis=-1, keepdims=True)
    s = jnp.mean((h - u) ** 2, axis=-1, keepdims=True)
    h = (h - u) / jnp.sqrt(s + 1e-12)
    return params["ln_w"][:Hs] * h + params["ln_b"][:Hs]


# ----------------------------------------------------------------------------
def xavier_uniform(key, shape):
    fan_out, fan_in = shape
    bound = math.sqrt(6.0 / (fan_in + fan_out))
    return jax.random.uniform(key, shape, jnp.float32, -bound, bound)


if __name__ == "__main__":
    key = jax.random.PRNGKey(0)
    B, S, H = 2, 8, 32
    sample_hidden_dim = 24   # exercise the supernet sub-dim sampling (non-128 multiple)

    k = jax.random.split(key, 6)
    params = {
        "dense_w": xavier_uniform(k[0], (H, H)),                  # SuperLinear(H, H)
        "dense_b": 0.1 * jax.random.normal(k[1], (H,), jnp.float32),
        "ln_w": 1.0 + 0.05 * jax.random.normal(k[2], (H,), jnp.float32),  # SuperBertLayerNorm
        "ln_b": 0.05 * jax.random.normal(k[3], (H,), jnp.float32),
    }

    hidden_states = jax.random.normal(k[4], (B, S, H), jnp.float32)

    out = super_bert_prediction_head_transform(
        hidden_states, params, sample_hidden_dim)
    jax.block_until_ready(out)

    out_ref = reference(hidden_states, params, sample_hidden_dim)

    assert out.shape == (B, S, sample_hidden_dim)
    assert jnp.allclose(out, out_ref, atol=1e-4, rtol=1e-4), (
        float(jnp.max(jnp.abs(out - out_ref))))

    print("KERNEL_OK")
</pallas_src>

<mosaic_0001>
module attributes {stable_mosaic.version = 11 : i64} {
  func.func @head_transform_kernel(%arg0: i32, %arg1: memref<16x128xf32, #tpu.memory_space<vmem>>, %arg2: memref<128x128xf32, #tpu.memory_space<vmem>>, %arg3: memref<1x128xf32, #tpu.memory_space<vmem>>, %arg4: memref<1x128xf32, #tpu.memory_space<vmem>>, %arg5: memref<1x128xf32, #tpu.memory_space<vmem>>, %arg6: memref<16x128xf32, #tpu.memory_space<vmem>>) attributes {dimension_semantics = [#tpu.dimension_semantics<parallel>], iteration_bounds = array<i64: 1>, scalar_prefetch = 0 : i64, scratch_operands = 0 : i64, tpu.core_type = #tpu.core_type<tc>, window_params = [{transform_indices = @transform_0, window_bounds = array<i64: 16, 128>}, {pipeline_mode = #tpu.pipeline_mode<synchronous>, transform_indices = @transform_1, window_bounds = array<i64: 128, 128>}, {pipeline_mode = #tpu.pipeline_mode<synchronous>, transform_indices = @transform_2, window_bounds = array<i64: 1, 128>}, {pipeline_mode = #tpu.pipeline_mode<synchronous>, transform_indices = @transform_3, window_bounds = array<i64: 1, 128>}, {pipeline_mode = #tpu.pipeline_mode<synchronous>, transform_indices = @transform_4, window_bounds = array<i64: 1, 128>}, {transform_indices = @transform_5, window_bounds = array<i64: 16, 128>}]} {
    %c0 = arith.constant 0 : index
    %c0_0 = arith.constant 0 : index
    %0 = vector.load %arg1[%c0, %c0_0] : memref<16x128xf32, #tpu.memory_space<vmem>>, vector<16x128xf32>
    %c0_1 = arith.constant 0 : index
    %c0_2 = arith.constant 0 : index
    %1 = vector.load %arg2[%c0_1, %c0_2] : memref<128x128xf32, #tpu.memory_space<vmem>>, vector<128x128xf32>
    %cst = arith.constant dense<0.000000e+00> : vector<16x128xf32>
    %2 = tpu.matmul %0, %1, %cst {dimension_numbers = #tpu.dot_dimension_numbers<[1], [0], [0], [1], [0, 0, 1, 1], [], []>} : vector<16x128xf32>, vector<128x128xf32>, vector<16x128xf32> -> vector<16x128xf32>
    %c0_3 = arith.constant 0 : index
    %c0_4 = arith.constant 0 : index
    %3 = vector.load %arg3[%c0_3, %c0_4] : memref<1x128xf32, #tpu.memory_space<vmem>>, vector<1x128xf32>
    %4 = vector.broadcast %3 : vector<1x128xf32> to vector<16x128xf32>
    %5 = arith.addf %2, %4 : vector<16x128xf32>
    %cst_5 = arith.constant 5.000000e-01 : f32
    %6 = vector.broadcast %cst_5 : f32 to vector<16x128xf32>
    %7 = arith.mulf %5, %6 : vector<16x128xf32>
    %cst_6 = arith.constant 0.707106769 : f32
    %8 = vector.broadcast %cst_6 : f32 to vector<16x128xf32>
    %9 = arith.mulf %5, %8 : vector<16x128xf32>
    %10 = math.erf %9 : vector<16x128xf32>
    %cst_7 = arith.constant 1.000000e+00 : f32
    %11 = vector.broadcast %cst_7 : f32 to vector<16x128xf32>
    %12 = arith.addf %11, %10 : vector<16x128xf32>
    %13 = arith.mulf %7, %12 : vector<16x128xf32>
    %cst_8 = arith.constant dense<0.000000e+00> : vector<16xf32>
    %14 = vector.multi_reduction <add>, %13, %cst_8 [1] : vector<16x128xf32> to vector<16xf32>
    %15 = vector.shape_cast %14 : vector<16xf32> to vector<16x1xf32>
    %cst_9 = arith.constant 0.0416666679 : f32
    %16 = vector.broadcast %cst_9 : f32 to vector<16x1xf32>
    %17 = arith.mulf %15, %16 : vector<16x1xf32>
    %18 = vector.broadcast %17 : vector<16x1xf32> to vector<16x128xf32>
    %19 = arith.subf %13, %18 : vector<16x128xf32>
    %20 = tpu.iota {dimensions = array<i32: 1>} : vector<16x128xi32>
    %c24_i32 = arith.constant 24 : i32
    %21 = vector.broadcast %c24_i32 : i32 to vector<16x128xi32>
    %22 = arith.cmpi slt, %20, %21 : vector<16x128xi32>
    %cst_10 = arith.constant 0.000000e+00 : f32
    %23 = vector.broadcast %cst_10 : f32 to vector<16x128xf32>
    %24 = arith.select %22, %19, %23 : vector<16x128xi1>, vector<16x128xf32>
    %25 = arith.mulf %24, %24 : vector<16x128xf32>
    %cst_11 = arith.constant dense<0.000000e+00> : vector<16xf32>
    %26 = vector.multi_reduction <add>, %25, %cst_11 [1] : vector<16x128xf32> to vector<16xf32>
    %27 = vector.shape_cast %26 : vector<16xf32> to vector<16x1xf32>
    %cst_12 = arith.constant 0.0416666679 : f32
    %28 = vector.broadcast %cst_12 : f32 to vector<16x1xf32>
    %29 = arith.mulf %27, %28 : vector<16x1xf32>
    %cst_13 = arith.constant 9.99999996E-13 : f32
    %30 = vector.broadcast %cst_13 : f32 to vector<16x1xf32>
    %31 = arith.addf %29, %30 : vector<16x1xf32>
    %32 = math.rsqrt %31 : vector<16x1xf32>
    %33 = vector.broadcast %32 : vector<16x1xf32> to vector<16x128xf32>
    %34 = arith.mulf %19, %33 : vector<16x128xf32>
    %c0_14 = arith.constant 0 : index
    %c0_15 = arith.constant 0 : index
    %35 = vector.load %arg4[%c0_14, %c0_15] : memref<1x128xf32, #tpu.memory_space<vmem>>, vector<1x128xf32>
    %36 = vector.broadcast %35 : vector<1x128xf32> to vector<16x128xf32>
    %37 = arith.mulf %36, %34 : vector<16x128xf32>
    %c0_16 = arith.constant 0 : index
    %c0_17 = arith.constant 0 : index
    %38 = vector.load %arg5[%c0_16, %c0_17] : memref<1x128xf32, #tpu.memory_space<vmem>>, vector<1x128xf32>
    %39 = vector.broadcast %38 : vector<1x128xf32> to vector<16x128xf32>
    %40 = arith.addf %37, %39 : vector<16x128xf32>
    %c0_18 = arith.constant 0 : index
    %c0_19 = arith.constant 0 : index
    %41 = vector.load %arg6[%c0_18, %c0_19] : memref<16x128xf32, #tpu.memory_space<vmem>>, vector<16x128xf32>
    tpu.vector_store %arg6[%c0_18, %c0_19], %40 {strides = array<i32>} : memref<16x128xf32, #tpu.memory_space<vmem>>, vector<16x128xf32>,
    return
  }
  func.func @transform_0(%arg0: i32) -> (i32, i32) {
    %c0_i32 = arith.constant 0 : i32
    %c0_i32_0 = arith.constant 0 : i32
    return %arg0, %c0_i32 : i32, i32
  }
  func.func @transform_1(%arg0: i32) -> (i32, i32) {
    %c0_i32 = arith.constant 0 : i32
    %c0_i32_0 = arith.constant 0 : i32
    %c0_i32_1 = arith.constant 0 : i32
    return %c0_i32, %c0_i32_0 : i32, i32
  }
  func.func @transform_2(%arg0: i32) -> (i32, i32) {
    %c0_i32 = arith.constant 0 : i32
    %c0_i32_0 = arith.constant 0 : i32
    %c0_i32_1 = arith.constant 0 : i32
    return %c0_i32, %c0_i32_0 : i32, i32
  }
  func.func @transform_3(%arg0: i32) -> (i32, i32) {
    %c0_i32 = arith.constant 0 : i32
    %c0_i32_0 = arith.constant 0 : i32
    %c0_i32_1 = arith.constant 0 : i32
    return %c0_i32, %c0_i32_0 : i32, i32
  }
  func.func @transform_4(%arg0: i32) -> (i32, i32) {
    %c0_i32 = arith.constant 0 : i32
    %c0_i32_0 = arith.constant 0 : i32
    %c0_i32_1 = arith.constant 0 : i32
    return %c0_i32, %c0_i32_0 : i32, i32
  }
  func.func @transform_5(%arg0: i32) -> (i32, i32) {
    %c0_i32 = arith.constant 0 : i32
    %c0_i32_0 = arith.constant 0 : i32
    return %arg0, %c0_i32 : i32, i32
  }
}

</mosaic_0001>

<llo_original>
// kernel: tpu_custom_call.1
$region0: #{tpu_custom_call.1}
  #allocation0 [shape = 'u32[]', space=smem, size = 0x4, offset = 0x4, fixed_abs, tag = 'smem constant byte address 0x4 - core index']
  #allocation1 [shape = 'u32[144,128]{1,0:T(1,128)}', space=vmem, size = 0x12000, scoped, tag = 'internal scratch']
  %s0 = inlined_call_operand.hbm [shape: f32[16,128], index: 0, kind: input, shape index: {}]
  %s1 = inlined_call_operand.hbm [shape: f32[128,128], index: 1, kind: input, shape index: {}]
  %s2 = inlined_call_operand.vmem [shape: f32[1,128], index: 2, kind: input, shape index: {}]
  %s3 = inlined_call_operand.vmem [shape: f32[1,128], index: 3, kind: input, shape index: {}]
  %s4 = inlined_call_operand.vmem [shape: f32[1,128], index: 4, kind: input, shape index: {}]
  %s5 = inlined_call_operand.hbm [shape: f32[16,128], index: 5, kind: output, shape index: {}]
  %s6 = sld [smem:[#allocation0]]
  $region38: #{tpu_custom_call.1} parent=0
    _
  %s8 = ssub.s32 1, %s6
  %s9 = scalar_select 0, %s8, %s6
  $region1: #{tpu_custom_call.1} parent=0
    #allocation2 [shape = 'u8[8192]{0}', space=vmem, size = 0x2000, scoped, tag = 'input window, operand 0, single buffered']
    #allocation3 [shape = 's32[1]{0}', space=sflag, size = 0x4, scoped, tag = 'scoped memory for tpu_custom_call.1']
    #allocation4 [shape = 's32[1]{0}', space=sflag, size = 0x4, scoped, tag = 'scoped memory for tpu_custom_call.1']
    #allocation5 [shape = 'u8[65536]{0}', space=vmem, size = 0x10000, scoped, tag = 'input window, operand 1, single buffered']
    #allocation6 [shape = 's32[1]{0}', space=sflag, size = 0x4, scoped, tag = 'scoped memory for tpu_custom_call.1']
    #allocation7 [shape = 'u8[8192]{0}', space=vmem, size = 0x2000, scoped, tag = 'output window, operand 0, single buffered']
    %10 = vsyncpa [#allocation3], 0
    %11 = vsyncpa [#allocation6], 0
    %12 = vsyncpa [#allocation4], 0
    // Predicated region
    $region2: #{tpu_custom_call.1} parent=1 // pred_check
      _
    $region3: #{tpu_custom_call.1} parent=1 // pred_check_branch
      %14 = sbr.rel (0) target = $region5
    $region4: #{tpu_custom_call.1} parent=1 // pred_region
      %s16 = ssub.s32 256, 256
      %17 = vsyncadd [#allocation3], %s16
      %s18 = sshll.u32 [#allocation2], 4
      %s19 = int_to_ptr.vmem [resolvable:$true] %s18
      %24 = dma.hbm_to_vmem [thread:$0]  %s0, 256, %s19, [#allocation3], 128, 128, 8
    $region5: #{tpu_custom_call.1} parent=1 // pred_fallthru
      _
    // Predicated region
    $region6: #{tpu_custom_call.1} parent=1 // pred_check
      _
    $region7: #{tpu_custom_call.1} parent=1 // pred_check_branch
      %26 = sbr.rel (0) target = $region9
    $region8: #{tpu_custom_call.1} parent=1 // pred_region
      %s28 = ssub.s32 2048, 2048
      %29 = vsyncadd [#allocation6], %s28
      %s30 = sshll.u32 [#allocation5], 4
      %s31 = int_to_ptr.vmem [resolvable:$true] %s30
      %36 = dma.hbm_to_vmem [thread:$0]  %s1, 2048, %s31, [#allocation6], 128, 128, 8
    $region9: #{tpu_custom_call.1} parent=1 // pred_fallthru
      _
    // Predicated region
    $region10: #{tpu_custom_call.1} parent=1 // pred_check
      _
    $region11: #{tpu_custom_call.1} parent=1 // pred_check_branch
      %38 = sbr.rel (0) target = $region13
    $region12: #{tpu_custom_call.1} parent=1 // pred_region
      _
    $region13: #{tpu_custom_call.1} parent=1 // pred_fallthru
      _
    // Predicated region
    $region14: #{tpu_custom_call.1} parent=1 // pred_check
      _
    $region15: #{tpu_custom_call.1} parent=1 // pred_check_branch
      %40 = sbr.rel (0) target = $region17
    $region16: #{tpu_custom_call.1} parent=1 // pred_region
      _
    $region17: #{tpu_custom_call.1} parent=1 // pred_fallthru
      _
    // Predicated region
    $region18: #{tpu_custom_call.1} parent=1 // pred_check
      _
    $region19: #{tpu_custom_call.1} parent=1 // pred_check_branch
      %42 = sbr.rel (0) target = $region21
    $region20: #{tpu_custom_call.1} parent=1 // pred_region
      _
    $region21: #{tpu_custom_call.1} parent=1 // pred_fallthru
      _
    // Predicated region
    $region22: #{tpu_custom_call.1} parent=1 // pred_check
      _
    $region23: #{tpu_custom_call.1} parent=1 // pred_check_branch
      %44 = sbr.rel (0) target = $region25
    $region24: #{tpu_custom_call.1} parent=1 // pred_region
      %45 = dma.done [#allocation3], 256
    $region25: #{tpu_custom_call.1} parent=1 // pred_fallthru
      _
    // Predicated region
    $region26: #{tpu_custom_call.1} parent=1 // pred_check
      _
    $region27: #{tpu_custom_call.1} parent=1 // pred_check_branch
      %47 = sbr.rel (0) target = $region29
    $region28: #{tpu_custom_call.1} parent=1 // pred_region
      %48 = dma.done [#allocation6], 2048
    $region29: #{tpu_custom_call.1} parent=1 // pred_fallthru
      _
    %v49 = vld [vmem:[#allocation2] sm:$0xff]
    %v50 = vld [vmem:[#allocation2 + $0x8] sm:$0xff]
    %v51 = vld [vmem:[#allocation5] sm:$0xff]
    %v52 = vld [vmem:[#allocation5 + $0x8] sm:$0xff]
    %v53 = vld [vmem:[#allocation5 + $0x10] sm:$0xff]
    %v54 = vld [vmem:[#allocation5 + $0x18] sm:$0xff]
    %v55 = vld [vmem:[#allocation5 + $0x20] sm:$0xff]
    %v56 = vld [vmem:[#allocation5 + $0x28] sm:$0xff]
    %v57 = vld [vmem:[#allocation5 + $0x30] sm:$0xff]
    %v58 = vld [vmem:[#allocation5 + $0x38] sm:$0xff]
    %v59 = vld [vmem:[#allocation5 + $0x40] sm:$0xff]
    %v60 = vld [vmem:[#allocation5 + $0x48] sm:$0xff]
    %v61 = vld [vmem:[#allocation5 + $0x50] sm:$0xff]
    %v62 = vld [vmem:[#allocation5 + $0x58] sm:$0xff]
    %v63 = vld [vmem:[#allocation5 + $0x60] sm:$0xff]
    %v64 = vld [vmem:[#allocation5 + $0x68] sm:$0xff]
    %v65 = vld [vmem:[#allocation5 + $0x70] sm:$0xff]
    %v66 = vld [vmem:[#allocation5 + $0x78] sm:$0xff]
    %v67 = vld [vmem:[%s2] sm:$0x1]
    %v69 = vlaneseq
    %v70 = vshrl.u32 %v69, 7
    %v71 = vsub.s32 0, %v70
    %v72 = vrot.slane %v67, %v71
    %74 = vmatprep.subr.mxu0 0.0
    %75 = vmatpush1.msra.mxu0 %v51
    %76 = vmatprep.subr.mxu0 0.0
    %77 = vmatpush1.msra.mxu0 %v52
    %78 = vmatprep.subr.mxu0 0.0
    %79 = vmatpush1.msra.mxu0 %v53
    %80 = vmatprep.subr.mxu0 0.0
    %81 = vmatpush1.msra.mxu0 %v54
    %82 = vmatprep.subr.mxu0 0.0
    %83 = vmatpush1.msra.mxu0 %v55
    %84 = vmatprep.subr.mxu0 0.0
    %85 = vmatpush1.msra.mxu0 %v56
    %86 = vmatprep.subr.mxu0 0.0
    %87 = vmatpush1.msra.mxu0 %v57
    %88 = vmatprep.subr.mxu0 0.0
    %89 = vmatpush1.msra.mxu0 %v58
    %90 = vmatprep.subr.mxu0 0.0
    %91 = vmatpush1.msra.mxu0 %v59
    %92 = vmatprep.subr.mxu0 0.0
    %93 = vmatpush1.msra.mxu0 %v60
    %94 = vmatprep.subr.mxu0 0.0
    %95 = vmatpush1.msra.mxu0 %v61
    %96 = vmatprep.subr.mxu0 0.0
    %97 = vmatpush1.msra.mxu0 %v62
    %98 = vmatprep.subr.mxu0 0.0
    %99 = vmatpush1.msra.mxu0 %v63
    %100 = vmatprep.subr.mxu0 0.0
    %101 = vmatpush1.msra.mxu0 %v64
    %102 = vmatprep.subr.mxu0 0.0
    %103 = vmatpush1.msra.mxu0 %v65
    %104 = vmatprep.subr.mxu0 0.0
    %105 = vmatpush1.msra.mxu0 %v66
    %106 = vmatprep.subr.mxu0 0.0
    %107 = vmatpush1.msra.mxu0 0.0
    %108 = vmatprep.subr.mxu0 0.0
    %109 = vmatpush1.msra.mxu0 0.0
    %110 = vmatprep.subr.mxu0 0.0
    %111 = vmatpush1.msra.mxu0 0.0
    %112 = vmatprep.subr.mxu0 0.0
    %113 = vmatpush1.msra.mxu0 0.0
    %114 = vmatprep.subr.mxu0 0.0
    %115 = vmatpush1.msra.mxu0 0.0
    %116 = vmatprep.subr.mxu0 0.0
    %117 = vmatpush1.msra.mxu0 0.0
    %118 = vmatprep.subr.mxu0 0.0
    %119 = vmatpush1.msra.mxu0 0.0
    %120 = vmatprep.subr.mxu0 0.0
    %121 = vmatpush1.msra.mxu0 0.0
    %122 = vmatprep.subr.mxu0 0.0
    %123 = vmatpush1.msra.mxu0 0.0
    %124 = vmatprep.subr.mxu0 0.0
    %125 = vmatpush1.msra.mxu0 0.0
    %126 = vmatprep.subr.mxu0 0.0
    %127 = vmatpush1.msra.mxu0 0.0
    %128 = vmatprep.subr.mxu0 0.0
    %129 = vmatpush1.msra.mxu0 0.0
    %130 = vmatprep.subr.mxu0 0.0
    %131 = vmatpush1.msra.mxu0 0.0
    %132 = vmatprep.subr.mxu0 0.0
    %133 = vmatpush1.msra.mxu0 0.0
    %134 = vmatprep.subr.mxu0 0.0
    %135 = vmatpush1.msra.mxu0 0.0
    %136 = vmatprep.subr.mxu0 0.0
    %137 = vmatpush1.msra.mxu0 0.0
    %138 = vmatprep.mubr.f32.mxu0 0.0
    %139 = vmatmul.mubr.f32.gmra.mrb[0].mxu0 %v49
    %v140 = vpop.f32.mrb[0].mxu0
    %v141 = vadd.f32 %v72, %v140
    %v142 = vpop.f32.mrb[0].mxu0
    %143 = vmatprep.mubr.f32.mxu0 0.0
    %144 = vmatmul.mubr.f32.gmra.mrb[0].mxu0 %v50
    %v145 = vpop.f32.mrb[0].mxu0
    %v146 = vadd.f32 %v72, %v145
    %v147 = vpop.f32.mrb[0].mxu0
    %148 = vdwg.mxu0
    %v149 = vmul.f32 %v141, 0.5
    %v150 = vmul.f32 %v146, 0.5
    %v151 = vmul.f32 %v141, 0.70710677
    %v152 = vmul.f32 %v146, 0.70710677
    %v153 = verf.f32.pop %v151
    %v154 = verf.f32.pop %v152
    %v155 = vadd.f32 %v153, 1.0
    %v156 = vadd.f32 %v154, 1.0
    %v157 = vmul.f32 %v149, %v155
    %v158 = vmul.f32 %v150, %v156
    %159 = vadd.xlane.f32.xlu0 %v157
    %v160 = vpop.xlane.xlu0 %159
    %161 = vadd.xlane.f32.xlu0 %v158
    %v162 = vpop.xlane.xlu0 %161
    %v163 = vmul.f32 %v160, 0.041666668
    %v164 = vmul.f32 %v162, 0.041666668
    %v165 = vsub.f32 %v157, %v163
    %v166 = vsub.f32 %v158, %v164
    %v167 = vlaneseq
    %v168 = vand.u32 %v167, 127
    %vm169 = vcmp.lt.s32.totalorder %v168, 24
    %v170 = vsel %vm169, %v165, 0.0
    %v171 = vsel %vm169, %v166, 0.0
    %v172 = vmul.f32 %v170, %v170
    %v173 = vmul.f32 %v171, %v171
    %174 = vadd.xlane.f32.xlu0 %v172
    %v175 = vpop.xlane.xlu0 %174
    %176 = vadd.xlane.f32.xlu0 %v173
    %v177 = vpop.xlane.xlu0 %176
    %v178 = vmul.f32 %v175, 0.041666668
    %v179 = vmul.f32 %v177, 0.041666668
    %v180 = vadd.f32 %v178, 1e-12
    %v181 = vadd.f32 %v179, 1e-12
    %v182 = vrsqrt.pop %v180
    %v183 = vrsqrt.pop %v181
    %v184 = vmul.f32 %v165, %v182
    %v185 = vmul.f32 %v166, %v183
    %v186 = vld [vmem:[%s3] sm:$0x1]
    %v188 = vlaneseq
    %v189 = vshrl.u32 %v188, 7
    %v190 = vsub.s32 0, %v189
    %v191 = vrot.slane %v186, %v190
    %v193 = vmul.f32 %v191, %v184
    %v194 = vmul.f32 %v191, %v185
    %v195 = vld [vmem:[%s4] sm:$0x1]
    %v197 = vlaneseq
    %v198 = vshrl.u32 %v197, 7
    %v199 = vsub.s32 0, %v198
    %v200 = vrot.slane %v195, %v199
    %v202 = vadd.f32 %v193, %v200
    %v203 = vadd.f32 %v194, %v200
    %204 = vst [vmem:[#allocation7] sm:$0xff] %v202
    %205 = vst [vmem:[#allocation7 + $0x8] sm:$0xff] %v203
    // Predicated region
    $region30: #{tpu_custom_call.1} parent=1 // pred_check
      _
    $region31: #{tpu_custom_call.1} parent=1 // pred_check_branch
      %207 = sbr.rel (0) target = $region33
    $region32: #{tpu_custom_call.1} parent=1 // pred_region
      %s209 = ssub.s32 256, 256
      %210 = vsyncadd [#allocation4], %s209
      %s211 = sshll.u32 [#allocation7], 4
      %s212 = int_to_ptr.vmem [resolvable:$true] %s211
      %217 = dma.vmem_to_hbm [thread:$0]  %s212, 256, %s5, [#allocation4], 128, 128, 8
    $region33: #{tpu_custom_call.1} parent=1 // pred_fallthru
      _
    // Predicated region
    $region34: #{tpu_custom_call.1} parent=1 // pred_check
      _
    $region35: #{tpu_custom_call.1} parent=1 // pred_check_branch
      %219 = sbr.rel (0) target = $region37
    $region36: #{tpu_custom_call.1} parent=1 // pred_region
      %220 = dma.done [#allocation4], 256
    $region37: #{tpu_custom_call.1} parent=1 // pred_fallthru
      _
    %221 = vsyncpa [#allocation3], 1
    %222 = vsyncpa [#allocation6], 1
    %223 = vsyncpa [#allocation4], 1

</llo_original>
